<compile_context>
chip_gen: v6e
topology: v6e:2x2x1
jax: 0.10.0
libtpu: 0.0.40
codegen_flags: <defaults>
</compile_context>

<pallas_src>
import math

import jax
import jax.numpy as jnp
from jax import lax
from jax.experimental import pallas as pl
from jax.experimental.pallas import tpu as pltpu

# Same convention as the PyTorch module: layers = [input_dim, hidden..., out]
LAYERS = [2, 32, 32, 32, 1]
CHUNK = 512            # lanes per in-kernel compute chunk (h+z ~= 32 of 64 vregs)


def pinn_mlp_kernel(x_ref, t_ref, *refs):
    """Feature-major PINN MLP over one batch block.

    x_ref, t_ref : (n_chunks, 1, CHUNK)  -- batch on the lane axis, chunked
    refs         : w0a (H,1), w0b (H,1), b0 (H,1),        # first layer, pre-split
                   [w_i (H,H), b_i (H,1)] * n_hidden,     # dense hidden layers
                   wlT (H,1), bl (1,1),                   # last layer, pre-transposed
                   out_ref (n_chunks, 1, CHUNK)
    """
    out_ref = refs[-1]
    prm = refs[:-1]
    n_hidden = (len(prm) - 5) // 2
    w0a_ref, w0b_ref, b0_ref = prm[0], prm[1], prm[2]
    hidden_refs = [(prm[3 + 2 * i], prm[4 + 2 * i]) for i in range(n_hidden)]
    wl_ref, bl_ref = prm[3 + 2 * n_hidden], prm[4 + 2 * n_hidden]

    n_chunks, _, chunk = x_ref.shape

    # ---- hoisted, loop-invariant broadcasts & casts -------------------------
    # JAX does not CSE broadcast_in_dim; doing these per chunk would multiply
    # the VPU/XLU broadcast work by the trip count.
    h0 = b0_ref.shape[0]
    w0a = jnp.broadcast_to(w0a_ref[...], (h0, chunk))
    w0b = jnp.broadcast_to(w0b_ref[...], (h0, chunk))
    b0 = jnp.broadcast_to(b0_ref[...], (h0, chunk))
    # bf16 operands for the MXU (bf16-native on v6e/v7x, accepted on v5e);
    # accumulation and all VPU/EUP work stays in f32.
    hidden = [
        (w_ref[...].astype(jnp.bfloat16),
         jnp.broadcast_to(b_ref[...], (b_ref.shape[0], chunk)))
        for (w_ref, b_ref) in hidden_refs
    ]
    wl = jnp.broadcast_to(wl_ref[...], (wl_ref.shape[0], chunk))
    bl = jnp.broadcast_to(bl_ref[...], (1, chunk))

    def chunk_body(c, carry):
        xc = x_ref[c]                                   # (1, chunk)
        tc = t_ref[c]                                   # (1, chunk)
        # First layer (K=2): two broadcast FMAs on the VPU.  An MXU matmul
        # would pad K to the MXU tile and waste >99% of the array.
        z = w0a * xc + w0b * tc + b0                    # (H, chunk)
        h = jnp.tanh(z)
        # Dense HxH hidden layers on the MXU (bf16 operands, f32 accumulate).
        for (w_bf, b_bc) in hidden:
            z = jnp.dot(w_bf, h.astype(jnp.bfloat16),
                        preferred_element_type=jnp.float32) + b_bc
            h = jnp.tanh(z)
        # Last layer (dout=1): weighted row-sum on VPU+XLU, keeps the MXU free.
        o = jnp.sum(wl * h, axis=0, keepdims=True) + bl  # (1, chunk)
        out_ref[c] = o.astype(out_ref.dtype)
        return carry

    lax.fori_loop(0, n_chunks, chunk_body, 0, unroll=min(int(n_chunks), 8))


def init_params(key, layers):
    """nn.Linear default init (uniform +/- 1/sqrt(fan_in)).

    W stored as (out_features, in_features)  -- same as PyTorch.
    b stored as (out_features, 1)            -- column vector for the
                                                feature-major kernel.
    """
    params = []
    for i in range(len(layers) - 1):
        fan_in, fan_out = layers[i], layers[i + 1]
        key, kw, kb = jax.random.split(key, 3)
        bound = 1.0 / math.sqrt(fan_in)
        w = jax.random.uniform(kw, (fan_out, fan_in), jnp.float32, -bound, bound)
        b = jax.random.uniform(kb, (fan_out, 1), jnp.float32, -bound, bound)
        params.append((w, b))
    return params


def pinn_forward(x, t, params, *, block_lanes=16384, chunk=CHUNK):
    """Pallas equivalent of PINN.forward(x, t); x, t are (N, 1) -> (N, 1)."""
    assert params[0][0].shape[1] == 2, "first layer must take (x, t)"
    assert params[-1][0].shape[0] == 1, "last layer must have a single output"
    N = x.shape[0]

    # ---- batch tiling: CHUNK-lane compute chunks, many chunks per grid step.
    n_chunks = max(2, pl.cdiv(N, chunk))         # >= 2 chunks so the grid can
    max_bc = max(1, block_lanes // chunk)        # have >= 2 steps (v7x: 2 TCs)
    tb_chunks = max(1, min(max_bc, pl.cdiv(n_chunks, 2)))
    n_grid = pl.cdiv(n_chunks, tb_chunks)
    n_chunks_pad = n_grid * tb_chunks
    n_pad = n_chunks_pad * chunk

    def prep(v):  # (N, 1) -> (n_chunks_pad, 1, chunk), batch on the lane axis
        v = v.reshape(-1).astype(jnp.float32)
        v = jnp.pad(v, (0, n_pad - N))           # zero padding; sliced off below
        return v.reshape(n_chunks_pad, 1, chunk)

    xr, tr = prep(x), prep(t)

    # ---- parameter plumbing: wrapper-side layout, no in-kernel transposes ---
    (w0, b0) = params[0]
    (wl, bl) = params[-1]
    flat = [w0[:, 0:1], w0[:, 1:2], b0]          # first-layer weight pre-split
    for (w, b) in params[1:-1]:
        flat += [w, b]
    flat += [wl.T, bl]                           # last-layer weight pre-transposed

    io_spec = pl.BlockSpec((tb_chunks, 1, chunk), lambda i: (i, 0, 0))
    in_specs = [io_spec, io_spec]
    for p in flat:
        in_specs.append(pl.BlockSpec(p.shape, lambda i: (0, 0)))

    out = pl.pallas_call(
        pinn_mlp_kernel,
        out_shape=jax.ShapeDtypeStruct((n_chunks_pad, 1, chunk), jnp.float32),
        grid=(n_grid,),
        in_specs=in_specs,
        out_specs=io_spec,
        compiler_params=pltpu.CompilerParams(
            dimension_semantics=("parallel",)),
    )(xr, tr, *flat)

    return out.reshape(-1)[:N].reshape(N, 1)


def get_kappa(kappa_raw):
    # PINN.get_kappa: exp of a scalar parameter (pure glue, not a hot path).
    return jnp.exp(kappa_raw)


if __name__ == "__main__":
    key = jax.random.PRNGKey(0)
    k_params, kx, kt = jax.random.split(key, 3)

    params = init_params(k_params, LAYERS)
    kappa_raw = jnp.float32(-3.0)   # nn.Parameter(torch.tensor(-3.0))

    # Deliberately NOT a multiple of the chunk / block size -> exercises padding
    # and the >=2-grid-step (megacore) path.
    N = 300
    x = jax.random.normal(kx, (N, 1), jnp.float32)
    t = jax.random.normal(kt, (N, 1), jnp.float32)

    out = pinn_forward(x, t, params)
    jax.block_until_ready(out)

    # Pure-JAX f32 reference of the PyTorch math (h @ W.T + b.T).
    h = jnp.concatenate([x, t], axis=1)
    for i, (w, b) in enumerate(params):
        h = jnp.dot(h, w.T, precision=jax.lax.Precision.HIGHEST) + b.T
        if i < len(params) - 1:
            h = jnp.tanh(h)

    assert out.shape == (N, 1)
    # Hidden-layer MXU operands are bf16 (v6e/v7x native), so compare against
    # the f32 reference with a bf16-level tolerance.
    max_err = float(jnp.max(jnp.abs(out - h)))
    assert max_err < 3e-2, max_err

    _ = jax.block_until_ready(get_kappa(kappa_raw))

    print("KERNEL_OK")
</pallas_src>

<mosaic_0001>
module attributes {stable_mosaic.version = 11 : i64} {
  func.func @pinn_mlp_kernel(%arg0: i32, %arg1: memref<1x1x512xf32, #tpu.memory_space<vmem>>, %arg2: memref<1x1x512xf32, #tpu.memory_space<vmem>>, %arg3: memref<32x1xf32, #tpu.memory_space<vmem>>, %arg4: memref<32x1xf32, #tpu.memory_space<vmem>>, %arg5: memref<32x1xf32, #tpu.memory_space<vmem>>, %arg6: memref<32x32xf32, #tpu.memory_space<vmem>>, %arg7: memref<32x1xf32, #tpu.memory_space<vmem>>, %arg8: memref<32x32xf32, #tpu.memory_space<vmem>>, %arg9: memref<32x1xf32, #tpu.memory_space<vmem>>, %arg10: memref<32x1xf32, #tpu.memory_space<vmem>>, %arg11: memref<1x1xf32, #tpu.memory_space<vmem>>, %arg12: memref<1x1x512xf32, #tpu.memory_space<vmem>>) attributes {dimension_semantics = [#tpu.dimension_semantics<parallel>], iteration_bounds = array<i64: 2>, scalar_prefetch = 0 : i64, scratch_operands = 0 : i64, tpu.core_type = #tpu.core_type<tc>, window_params = [{transform_indices = @transform_0, window_bounds = array<i64: 1, 1, 512>}, {transform_indices = @transform_1, window_bounds = array<i64: 1, 1, 512>}, {pipeline_mode = #tpu.pipeline_mode<synchronous>, transform_indices = @transform_2, window_bounds = array<i64: 32, 1>}, {pipeline_mode = #tpu.pipeline_mode<synchronous>, transform_indices = @transform_3, window_bounds = array<i64: 32, 1>}, {pipeline_mode = #tpu.pipeline_mode<synchronous>, transform_indices = @transform_4, window_bounds = array<i64: 32, 1>}, {pipeline_mode = #tpu.pipeline_mode<synchronous>, transform_indices = @transform_5, window_bounds = array<i64: 32, 32>}, {pipeline_mode = #tpu.pipeline_mode<synchronous>, transform_indices = @transform_6, window_bounds = array<i64: 32, 1>}, {pipeline_mode = #tpu.pipeline_mode<synchronous>, transform_indices = @transform_7, window_bounds = array<i64: 32, 32>}, {pipeline_mode = #tpu.pipeline_mode<synchronous>, transform_indices = @transform_8, window_bounds = array<i64: 32, 1>}, {pipeline_mode = #tpu.pipeline_mode<synchronous>, transform_indices = @transform_9, window_bounds = array<i64: 32, 1>}, {pipeline_mode = #tpu.pipeline_mode<synchronous>, transform_indices = @transform_10, window_bounds = array<i64: 1, 1>}, {transform_indices = @transform_11, window_bounds = array<i64: 1, 1, 512>}]} {
    %c0 = arith.constant 0 : index
    %c0_0 = arith.constant 0 : index
    %0 = vector.load %arg3[%c0, %c0_0] : memref<32x1xf32, #tpu.memory_space<vmem>>, vector<32x1xf32>
    %1 = vector.shape_cast %0 : vector<32x1xf32> to vector<32x1xf32>
    %2 = vector.broadcast %1 : vector<32x1xf32> to vector<32x512xf32>
    %c0_1 = arith.constant 0 : index
    %c0_2 = arith.constant 0 : index
    %3 = vector.load %arg4[%c0_1, %c0_2] : memref<32x1xf32, #tpu.memory_space<vmem>>, vector<32x1xf32>
    %4 = vector.shape_cast %3 : vector<32x1xf32> to vector<32x1xf32>
    %5 = vector.broadcast %4 : vector<32x1xf32> to vector<32x512xf32>
    %c0_3 = arith.constant 0 : index
    %c0_4 = arith.constant 0 : index
    %6 = vector.load %arg5[%c0_3, %c0_4] : memref<32x1xf32, #tpu.memory_space<vmem>>, vector<32x1xf32>
    %7 = vector.shape_cast %6 : vector<32x1xf32> to vector<32x1xf32>
    %8 = vector.broadcast %7 : vector<32x1xf32> to vector<32x512xf32>
    %c0_5 = arith.constant 0 : index
    %c0_6 = arith.constant 0 : index
    %9 = vector.load %arg6[%c0_5, %c0_6] : memref<32x32xf32, #tpu.memory_space<vmem>>, vector<32x32xf32>
    %10 = arith.truncf %9 : vector<32x32xf32> to vector<32x32xbf16>
    %c0_7 = arith.constant 0 : index
    %c0_8 = arith.constant 0 : index
    %11 = vector.load %arg7[%c0_7, %c0_8] : memref<32x1xf32, #tpu.memory_space<vmem>>, vector<32x1xf32>
    %12 = vector.shape_cast %11 : vector<32x1xf32> to vector<32x1xf32>
    %13 = vector.broadcast %12 : vector<32x1xf32> to vector<32x512xf32>
    %c0_9 = arith.constant 0 : index
    %c0_10 = arith.constant 0 : index
    %14 = vector.load %arg8[%c0_9, %c0_10] : memref<32x32xf32, #tpu.memory_space<vmem>>, vector<32x32xf32>
    %15 = arith.truncf %14 : vector<32x32xf32> to vector<32x32xbf16>
    %c0_11 = arith.constant 0 : index
    %c0_12 = arith.constant 0 : index
    %16 = vector.load %arg9[%c0_11, %c0_12] : memref<32x1xf32, #tpu.memory_space<vmem>>, vector<32x1xf32>
    %17 = vector.shape_cast %16 : vector<32x1xf32> to vector<32x1xf32>
    %18 = vector.broadcast %17 : vector<32x1xf32> to vector<32x512xf32>
    %c0_13 = arith.constant 0 : index
    %c0_14 = arith.constant 0 : index
    %19 = vector.load %arg10[%c0_13, %c0_14] : memref<32x1xf32, #tpu.memory_space<vmem>>, vector<32x1xf32>
    %20 = vector.shape_cast %19 : vector<32x1xf32> to vector<32x1xf32>
    %21 = vector.broadcast %20 : vector<32x1xf32> to vector<32x512xf32>
    %c0_15 = arith.constant 0 : index
    %c0_16 = arith.constant 0 : index
    %22 = vector.load %arg11[%c0_15, %c0_16] : memref<1x1xf32, #tpu.memory_space<vmem>>, vector<1x1xf32>
    %23 = vector.shape_cast %22 : vector<1x1xf32> to vector<1x1xf32>
    %24 = vector.broadcast %23 : vector<1x1xf32> to vector<1x512xf32>
    %c0_i32 = arith.constant 0 : i32
    %25 = arith.index_cast %c0_i32 : i32 to index
    %c0_17 = arith.constant 0 : index
    %c0_18 = arith.constant 0 : index
    %26 = vector.load %arg1[%25, %c0_17, %c0_18] : memref<1x1x512xf32, #tpu.memory_space<vmem>>, vector<1x1x512xf32>
    %27 = vector.shape_cast %26 : vector<1x1x512xf32> to vector<1x512xf32>
    %28 = arith.index_cast %c0_i32 : i32 to index
    %c0_19 = arith.constant 0 : index
    %c0_20 = arith.constant 0 : index
    %29 = vector.load %arg2[%28, %c0_19, %c0_20] : memref<1x1x512xf32, #tpu.memory_space<vmem>>, vector<1x1x512xf32>
    %30 = vector.shape_cast %29 : vector<1x1x512xf32> to vector<1x512xf32>
    %31 = vector.broadcast %27 : vector<1x512xf32> to vector<32x512xf32>
    %32 = arith.mulf %2, %31 : vector<32x512xf32>
    %33 = vector.broadcast %30 : vector<1x512xf32> to vector<32x512xf32>
    %34 = arith.mulf %5, %33 : vector<32x512xf32>
    %35 = arith.addf %32, %34 : vector<32x512xf32>
    %36 = arith.addf %35, %8 : vector<32x512xf32>
    %37 = math.tanh %36 : vector<32x512xf32>
    %38 = arith.truncf %37 : vector<32x512xf32> to vector<32x512xbf16>
    %cst = arith.constant dense<0.000000e+00> : vector<32x512xf32>
    %39 = tpu.matmul %10, %38, %cst {dimension_numbers = #tpu.dot_dimension_numbers<[1], [0], [0], [1], [0, 0, 1, 1], [], []>} : vector<32x32xbf16>, vector<32x512xbf16>, vector<32x512xf32> -> vector<32x512xf32>
    %40 = arith.addf %39, %13 : vector<32x512xf32>
    %41 = math.tanh %40 : vector<32x512xf32>
    %42 = arith.truncf %41 : vector<32x512xf32> to vector<32x512xbf16>
    %cst_21 = arith.constant dense<0.000000e+00> : vector<32x512xf32>
    %43 = tpu.matmul %15, %42, %cst_21 {dimension_numbers = #tpu.dot_dimension_numbers<[1], [0], [0], [1], [0, 0, 1, 1], [], []>} : vector<32x32xbf16>, vector<32x512xbf16>, vector<32x512xf32> -> vector<32x512xf32>
    %44 = arith.addf %43, %18 : vector<32x512xf32>
    %45 = math.tanh %44 : vector<32x512xf32>
    %46 = arith.mulf %21, %45 : vector<32x512xf32>
    %cst_22 = arith.constant dense<0.000000e+00> : vector<512xf32>
    %47 = vector.multi_reduction <add>, %46, %cst_22 [0] : vector<32x512xf32> to vector<512xf32>
    %48 = vector.shape_cast %47 : vector<512xf32> to vector<1x512xf32>
    %49 = arith.addf %48, %24 : vector<1x512xf32>
    %50 = arith.index_cast %c0_i32 : i32 to index
    %c0_23 = arith.constant 0 : index
    %c0_24 = arith.constant 0 : index
    %51 = vector.load %arg12[%50, %c0_23, %c0_24] : memref<1x1x512xf32, #tpu.memory_space<vmem>>, vector<1x1x512xf32>
    %52 = vector.shape_cast %51 : vector<1x1x512xf32> to vector<1x512xf32>
    %53 = vector.shape_cast %49 : vector<1x512xf32> to vector<1x1x512xf32>
    tpu.vector_store %arg12[%50, %c0_23, %c0_24], %53 {strides = array<i32>} : memref<1x1x512xf32, #tpu.memory_space<vmem>>, vector<1x1x512xf32>,
    %c1_i32 = arith.constant 1 : i32
    return
  }
  func.func @transform_0(%arg0: i32) -> (i32, i32, i32) {
    %c0_i32 = arith.constant 0 : i32
    %c0_i32_0 = arith.constant 0 : i32
    %c0_i32_1 = arith.constant 0 : i32
    return %arg0, %c0_i32, %c0_i32_0 : i32, i32, i32
  }
  func.func @transform_1(%arg0: i32) -> (i32, i32, i32) {
    %c0_i32 = arith.constant 0 : i32
    %c0_i32_0 = arith.constant 0 : i32
    %c0_i32_1 = arith.constant 0 : i32
    return %arg0, %c0_i32, %c0_i32_0 : i32, i32, i32
  }
  func.func @transform_2(%arg0: i32) -> (i32, i32) {
    %c0_i32 = arith.constant 0 : i32
    %c0_i32_0 = arith.constant 0 : i32
    %c0_i32_1 = arith.constant 0 : i32
    return %c0_i32, %c0_i32_0 : i32, i32
  }
  func.func @transform_3(%arg0: i32) -> (i32, i32) {
    %c0_i32 = arith.constant 0 : i32
    %c0_i32_0 = arith.constant 0 : i32
    %c0_i32_1 = arith.constant 0 : i32
    return %c0_i32, %c0_i32_0 : i32, i32
  }
  func.func @transform_4(%arg0: i32) -> (i32, i32) {
    %c0_i32 = arith.constant 0 : i32
    %c0_i32_0 = arith.constant 0 : i32
    %c0_i32_1 = arith.constant 0 : i32
    return %c0_i32, %c0_i32_0 : i32, i32
  }
  func.func @transform_5(%arg0: i32) -> (i32, i32) {
    %c0_i32 = arith.constant 0 : i32
    %c0_i32_0 = arith.constant 0 : i32
    %c0_i32_1 = arith.constant 0 : i32
    return %c0_i32, %c0_i32_0 : i32, i32
  }
  func.func @transform_6(%arg0: i32) -> (i32, i32) {
    %c0_i32 = arith.constant 0 : i32
    %c0_i32_0 = arith.constant 0 : i32
    %c0_i32_1 = arith.constant 0 : i32
    return %c0_i32, %c0_i32_0 : i32, i32
  }
  func.func @transform_7(%arg0: i32) -> (i32, i32) {
    %c0_i32 = arith.constant 0 : i32
    %c0_i32_0 = arith.constant 0 : i32
    %c0_i32_1 = arith.constant 0 : i32
    return %c0_i32, %c0_i32_0 : i32, i32
  }
  func.func @transform_8(%arg0: i32) -> (i32, i32) {
    %c0_i32 = arith.constant 0 : i32
    %c0_i32_0 = arith.constant 0 : i32
    %c0_i32_1 = arith.constant 0 : i32
    return %c0_i32, %c0_i32_0 : i32, i32
  }
  func.func @transform_9(%arg0: i32) -> (i32, i32) {
    %c0_i32 = arith.constant 0 : i32
    %c0_i32_0 = arith.constant 0 : i32
    %c0_i32_1 = arith.constant 0 : i32
    return %c0_i32, %c0_i32_0 : i32, i32
  }
  func.func @transform_10(%arg0: i32) -> (i32, i32) {
    %c0_i32 = arith.constant 0 : i32
    %c0_i32_0 = arith.constant 0 : i32
    %c0_i32_1 = arith.constant 0 : i32
    return %c0_i32, %c0_i32_0 : i32, i32
  }
  func.func @transform_11(%arg0: i32) -> (i32, i32, i32) {
    %c0_i32 = arith.constant 0 : i32
    %c0_i32_0 = arith.constant 0 : i32
    %c0_i32_1 = arith.constant 0 : i32
    return %arg0, %c0_i32, %c0_i32_0 : i32, i32, i32
  }
}

</mosaic_0001>

<llo_original>
// kernel: tpu_custom_call.1
$region0: #{tpu_custom_call.1}
  #allocation0 [shape = 'u32[]', space=smem, size = 0x4, offset = 0x4, fixed_abs, tag = 'smem constant byte address 0x4 - core index']
  #allocation1 [shape = 'u32[144,128]{1,0:T(1,128)}', space=vmem, size = 0x12000, scoped, tag = 'internal scratch']
  #allocation2 [shape = 'f32[1,1]{1,0:T(1,128)S(1)}', space=vmem, size = 0x200, scoped, tag = 'scoped memory for tpu_custom_call.1']
  %s0 = inlined_call_operand.vmem [shape: f32[2,1,512], index: 0, kind: input, shape index: {}]
  %s1 = inlined_call_operand.vmem [shape: f32[2,1,512], index: 1, kind: input, shape index: {}]
  %s2 = inlined_call_operand.vmem [shape: f32[32,1], index: 2, kind: input, shape index: {}]
  %s3 = inlined_call_operand.vmem [shape: f32[32,1], index: 3, kind: input, shape index: {}]
  %s4 = inlined_call_operand.vmem [shape: f32[32,1], index: 4, kind: input, shape index: {}]
  %s5 = inlined_call_operand.vmem [shape: f32[32,32], index: 5, kind: input, shape index: {}]
  %s6 = inlined_call_operand.vmem [shape: f32[32,1], index: 6, kind: input, shape index: {}]
  %s7 = inlined_call_operand.vmem [shape: f32[32,32], index: 7, kind: input, shape index: {}]
  %s8 = inlined_call_operand.vmem [shape: f32[32,1], index: 8, kind: input, shape index: {}]
  %s9 = inlined_call_operand.vmem [shape: f32[32,1], index: 9, kind: input, shape index: {}]
  %s10 = inlined_call_operand.<no memory space> [shape: f32[1,1], index: 10, kind: input, shape index: {}]
  %s11 = inlined_call_operand.hbm [shape: f32[2,1,512], index: 11, kind: output, shape index: {}]
  %s12 = sld [smem:[#allocation0]]
  $region77: #{tpu_custom_call.1} parent=0
    _
  %s14 = ssub.s32 1, %s12
  %s15 = scalar_select 0, %s14, %s12
  %v16 = vstv %s10
  %17 = vst [vmem:[#allocation2] sm:$0x1] %v16
  $region1: #{tpu_custom_call.1} parent=0
    #allocation3 [shape = 'u8[4096]{0}', space=vmem, size = 0x1000, scoped, tag = 'output window, operand 0']
    #allocation4 [shape = 's32[2]{0}', space=sflag, size = 0x8, scoped, tag = 'scoped memory for tpu_custom_call.1']
    %18 = vsyncpa [#allocation4], 0
    %s19 = scalar_lea.sflag [#allocation4], 1
    %20 = vsyncpa %s19, 0
    loop: start=0, step=1, limit=4
    $region2: #{tpu_custom_call.1} parent=1 // loop_pre_header
      _
    $region3: #{tpu_custom_call.1} parent=1 // loop_header
      %s22 = sphi 0, %s26
      %p23 = scmp.ge.s32.totalorder %s22, 4
      %s32 = sphi 0, %s34
      %s35 = sphi 0, %s32
      %s36 = sphi 0, %s35
      %s52 = sphi 0, %s36
      %s58 = sphi 0, %s60
      %s61 = sphi 0, %s58
      %s62 = sphi 0, %s61
      %s78 = sphi 0, %s62
      %s82 = sphi 0, %s82
      %s84 = sphi 0, %s82
      %s85 = sphi 0, %s84
      %s99 = sphi 0, %s85
      %s103 = sphi 0, %s103
      %s105 = sphi 0, %s103
      %s106 = sphi 0, %s105
      %s120 = sphi 0, %s106
      %s124 = sphi 0, %s124
      %s126 = sphi 0, %s124
      %s127 = sphi 0, %s126
      %s141 = sphi 0, %s127
      %s145 = sphi 0, %s145
      %s147 = sphi 0, %s145
      %s148 = sphi 0, %s147
      %s162 = sphi 0, %s148
      %s166 = sphi 0, %s166
      %s168 = sphi 0, %s166
      %s169 = sphi 0, %s168
      %s183 = sphi 0, %s169
      %s187 = sphi 0, %s187
      %s189 = sphi 0, %s187
      %s190 = sphi 0, %s189
      %s204 = sphi 0, %s190
      %s208 = sphi 0, %s208
      %s210 = sphi 0, %s208
      %s211 = sphi 0, %s210
      %s225 = sphi 0, %s211
      %s229 = sphi 0, %s229
      %s231 = sphi 0, %s229
      %s232 = sphi 0, %s231
      %s246 = sphi 0, %s232
      %s250 = sphi 0, %s250
      %s252 = sphi 0, %s250
      %s253 = sphi 0, %s252
      %s267 = sphi 0, %s253
      %s273 = sphi 0, %s275
      %s276 = sphi 0, %s273
      %s277 = sphi 0, %s276
      %s293 = sphi 0, %s277
    $region4: #{tpu_custom_call.1} parent=1 // loop_header_branch
      %25 = sbr.rel (%p23) target = $region8
    $region5: #{tpu_custom_call.1} parent=1 // loop_body
      %s27 = ssub.s32 %s22, 1
      %s28 = ssub.s32 %s22, 2
      %s29 = sadd.s32 %s22, 1
      %s30 = ssub.s32 %s22, %s29
      %p31 = scmp.eq.s32.totalorder %s30, 0
      %s33 = sadd.s32 %s32, 1
      %s34 = scalar_select %p31, %s32, %s33
      %p37 = pneg %p31
      %p38 = scmp.eq.s32.totalorder %s22, 1
      %p39 = por %p37, %p38
      %p40 = scmp.ne.s32.totalorder %s32, %s35
      %p41 = scmp.eq.s32.totalorder %s22, 0
      %p42 = por %p40, %p41
      %p43 = scmp.ne.s32.totalorder %s32, %s35
      %p44 = scmp.eq.s32.totalorder %s27, 1
      %p45 = por %p43, %p44
      %p46 = scmp.ne.s32.totalorder %s35, %s36
      %p47 = scmp.eq.s32.totalorder %s27, 0
      %p48 = por %p46, %p47
      %p49 = scmp.ne.s32.totalorder %s35, %s36
      %p50 = scmp.eq.s32.totalorder %s28, 1
      %p51 = por %p49, %p50
      %p53 = scmp.ne.s32.totalorder %s36, %s52
      %p54 = scmp.eq.s32.totalorder %s28, 0
      %p55 = por %p53, %p54
      %s56 = ssub.s32 %s22, %s29
      %p57 = scmp.eq.s32.totalorder %s56, 0
      %s59 = sadd.s32 %s58, 1
      %s60 = scalar_select %p57, %s58, %s59
      %p63 = pneg %p57
      %p64 = scmp.eq.s32.totalorder %s22, 1
      %p65 = por %p63, %p64
      %p66 = scmp.ne.s32.totalorder %s58, %s61
      %p67 = scmp.eq.s32.totalorder %s22, 0
      %p68 = por %p66, %p67
      %p69 = scmp.ne.s32.totalorder %s58, %s61
      %p70 = scmp.eq.s32.totalorder %s27, 1
      %p71 = por %p69, %p70
      %p72 = scmp.ne.s32.totalorder %s61, %s62
      %p73 = scmp.eq.s32.totalorder %s27, 0
      %p74 = por %p72, %p73
      %p75 = scmp.ne.s32.totalorder %s61, %s62
      %p76 = scmp.eq.s32.totalorder %s28, 1
      %p77 = por %p75, %p76
      %p79 = scmp.ne.s32.totalorder %s62, %s78
      %p80 = scmp.eq.s32.totalorder %s28, 0
      %p81 = por %p79, %p80
      %s83 = sadd.s32 %s82, 1
      %p86 = scmp.eq.s32.totalorder %s22, 1
      %p87 = scmp.ne.s32.totalorder %s82, %s84
      %p88 = scmp.eq.s32.totalorder %s22, 0
      %p89 = por %p87, %p88
      %p90 = scmp.ne.s32.totalorder %s82, %s84
      %p91 = scmp.eq.s32.totalorder %s27, 1
      %p92 = por %p90, %p91
      %p93 = scmp.ne.s32.totalorder %s84, %s85
      %p94 = scmp.eq.s32.totalorder %s27, 0
      %p95 = por %p93, %p94
      %p96 = scmp.ne.s32.totalorder %s84, %s85
      %p97 = scmp.eq.s32.totalorder %s28, 1
      %p98 = por %p96, %p97
      %p100 = scmp.ne.s32.totalorder %s85, %s99
      %p101 = scmp.eq.s32.totalorder %s28, 0
      %p102 = por %p100, %p101
      %s104 = sadd.s32 %s103, 1
      %p107 = scmp.eq.s32.totalorder %s22, 1
      %p108 = scmp.ne.s32.totalorder %s103, %s105
      %p109 = scmp.eq.s32.totalorder %s22, 0
      %p110 = por %p108, %p109
      %p111 = scmp.ne.s32.totalorder %s103, %s105
      %p112 = scmp.eq.s32.totalorder %s27, 1
      %p113 = por %p111, %p112
      %p114 = scmp.ne.s32.totalorder %s105, %s106
      %p115 = scmp.eq.s32.totalorder %s27, 0
      %p116 = por %p114, %p115
      %p117 = scmp.ne.s32.totalorder %s105, %s106
      %p118 = scmp.eq.s32.totalorder %s28, 1
      %p119 = por %p117, %p118
      %p121 = scmp.ne.s32.totalorder %s106, %s120
      %p122 = scmp.eq.s32.totalorder %s28, 0
      %p123 = por %p121, %p122
      %s125 = sadd.s32 %s124, 1
      %p128 = scmp.eq.s32.totalorder %s22, 1
      %p129 = scmp.ne.s32.totalorder %s124, %s126
      %p130 = scmp.eq.s32.totalorder %s22, 0
      %p131 = por %p129, %p130
      %p132 = scmp.ne.s32.totalorder %s124, %s126
      %p133 = scmp.eq.s32.totalorder %s27, 1
      %p134 = por %p132, %p133
      %p135 = scmp.ne.s32.totalorder %s126, %s127
      %p136 = scmp.eq.s32.totalorder %s27, 0
      %p137 = por %p135, %p136
      %p138 = scmp.ne.s32.totalorder %s126, %s127
      %p139 = scmp.eq.s32.totalorder %s28, 1
      %p140 = por %p138, %p139
      %p142 = scmp.ne.s32.totalorder %s127, %s141
      %p143 = scmp.eq.s32.totalorder %s28, 0
      %p144 = por %p142, %p143
      %s146 = sadd.s32 %s145, 1
      %p149 = scmp.eq.s32.totalorder %s22, 1
      %p150 = scmp.ne.s32.totalorder %s145, %s147
      %p151 = scmp.eq.s32.totalorder %s22, 0
      %p152 = por %p150, %p151
      %p153 = scmp.ne.s32.totalorder %s145, %s147
      %p154 = scmp.eq.s32.totalorder %s27, 1
      %p155 = por %p153, %p154
      %p156 = scmp.ne.s32.totalorder %s147, %s148
      %p157 = scmp.eq.s32.totalorder %s27, 0
      %p158 = por %p156, %p157
      %p159 = scmp.ne.s32.totalorder %s147, %s148
      %p160 = scmp.eq.s32.totalorder %s28, 1
      %p161 = por %p159, %p160
      %p163 = scmp.ne.s32.totalorder %s148, %s162
      %p164 = scmp.eq.s32.totalorder %s28, 0
      %p165 = por %p163, %p164
      %s167 = sadd.s32 %s166, 1
      %p170 = scmp.eq.s32.totalorder %s22, 1
      %p171 = scmp.ne.s32.totalorder %s166, %s168
      %p172 = scmp.eq.s32.totalorder %s22, 0
      %p173 = por %p171, %p172
      %p174 = scmp.ne.s32.totalorder %s166, %s168
      %p175 = scmp.eq.s32.totalorder %s27, 1
      %p176 = por %p174, %p175
      %p177 = scmp.ne.s32.totalorder %s168, %s169
      %p178 = scmp.eq.s32.totalorder %s27, 0
      %p179 = por %p177, %p178
      %p180 = scmp.ne.s32.totalorder %s168, %s169
      %p181 = scmp.eq.s32.totalorder %s28, 1
      %p182 = por %p180, %p181
      %p184 = scmp.ne.s32.totalorder %s169, %s183
      %p185 = scmp.eq.s32.totalorder %s28, 0
      %p186 = por %p184, %p185
      %s188 = sadd.s32 %s187, 1
      %p191 = scmp.eq.s32.totalorder %s22, 1
      %p192 = scmp.ne.s32.totalorder %s187, %s189
      %p193 = scmp.eq.s32.totalorder %s22, 0
      %p194 = por %p192, %p193
      %p195 = scmp.ne.s32.totalorder %s187, %s189
      %p196 = scmp.eq.s32.totalorder %s27, 1
      %p197 = por %p195, %p196
      %p198 = scmp.ne.s32.totalorder %s189, %s190
      %p199 = scmp.eq.s32.totalorder %s27, 0
      %p200 = por %p198, %p199
      %p201 = scmp.ne.s32.totalorder %s189, %s190
      %p202 = scmp.eq.s32.totalorder %s28, 1
      %p203 = por %p201, %p202
      %p205 = scmp.ne.s32.totalorder %s190, %s204
      %p206 = scmp.eq.s32.totalorder %s28, 0
      %p207 = por %p205, %p206
      %s209 = sadd.s32 %s208, 1
      %p212 = scmp.eq.s32.totalorder %s22, 1
      %p213 = scmp.ne.s32.totalorder %s208, %s210
      %p214 = scmp.eq.s32.totalorder %s22, 0
      %p215 = por %p213, %p214
      %p216 = scmp.ne.s32.totalorder %s208, %s210
      %p217 = scmp.eq.s32.totalorder %s27, 1
      %p218 = por %p216, %p217
      %p219 = scmp.ne.s32.totalorder %s210, %s211
      %p220 = scmp.eq.s32.totalorder %s27, 0
      %p221 = por %p219, %p220
      %p222 = scmp.ne.s32.totalorder %s210, %s211
      %p223 = scmp.eq.s32.totalorder %s28, 1
      %p224 = por %p222, %p223
      %p226 = scmp.ne.s32.totalorder %s211, %s225
      %p227 = scmp.eq.s32.totalorder %s28, 0
      %p228 = por %p226, %p227
      %s230 = sadd.s32 %s229, 1
      %p233 = scmp.eq.s32.totalorder %s22, 1
      %p234 = scmp.ne.s32.totalorder %s229, %s231
      %p235 = scmp.eq.s32.totalorder %s22, 0
      %p236 = por %p234, %p235
      %p237 = scmp.ne.s32.totalorder %s229, %s231
      %p238 = scmp.eq.s32.totalorder %s27, 1
      %p239 = por %p237, %p238
      %p240 = scmp.ne.s32.totalorder %s231, %s232
      %p241 = scmp.eq.s32.totalorder %s27, 0
      %p242 = por %p240, %p241
      %p243 = scmp.ne.s32.totalorder %s231, %s232
      %p244 = scmp.eq.s32.totalorder %s28, 1
      %p245 = por %p243, %p244
      %p247 = scmp.ne.s32.totalorder %s232, %s246
      %p248 = scmp.eq.s32.totalorder %s28, 0
      %p249 = por %p247, %p248
      %s251 = sadd.s32 %s250, 1
      %p254 = scmp.eq.s32.totalorder %s22, 1
      %p255 = scmp.ne.s32.totalorder %s250, %s252
      %p256 = scmp.eq.s32.totalorder %s22, 0
      %p257 = por %p255, %p256
      %p258 = scmp.ne.s32.totalorder %s250, %s252
      %p259 = scmp.eq.s32.totalorder %s27, 1
      %p260 = por %p258, %p259
      %p261 = scmp.ne.s32.totalorder %s252, %s253
      %p262 = scmp.eq.s32.totalorder %s27, 0
      %p263 = por %p261, %p262
      %p264 = scmp.ne.s32.totalorder %s252, %s253
      %p265 = scmp.eq.s32.totalorder %s28, 1
      %p266 = por %p264, %p265
      %p268 = scmp.ne.s32.totalorder %s253, %s267
      %p269 = scmp.eq.s32.totalorder %s28, 0
      %p270 = por %p268, %p269
      %s271 = ssub.s32 %s22, %s29
      %p272 = scmp.eq.s32.totalorder %s271, 0
      %s274 = sadd.s32 %s273, 1
      %s275 = scalar_select %p272, %s273, %s274
      %p278 = pneg %p272
      %p279 = scmp.eq.s32.totalorder %s22, 1
      %p280 = por %p278, %p279
      %p281 = scmp.ne.s32.totalorder %s273, %s276
      %p282 = scmp.eq.s32.totalorder %s22, 0
      %p283 = por %p281, %p282
      %p284 = scmp.ne.s32.totalorder %s273, %s276
      %p285 = scmp.eq.s32.totalorder %s27, 1
      %p286 = por %p284, %p285
      %p287 = scmp.ne.s32.totalorder %s276, %s277
      %p288 = scmp.eq.s32.totalorder %s27, 0
      %p289 = por %p287, %p288
      %p290 = scmp.ne.s32.totalorder %s276, %s277
      %p291 = scmp.eq.s32.totalorder %s28, 1
      %p292 = por %p290, %p291
      %p294 = scmp.ne.s32.totalorder %s277, %s293
      %p295 = scmp.eq.s32.totalorder %s28, 0
      %p296 = por %p294, %p295
      %p297 = scmp.le.s32.totalorder 1, %s22
      %p298 = scmp.lt.s32.totalorder %s22, 3
      %p299 = pnand %p297, %p298
      %p300 = pneg %p299
      // Predicated region
      $region9: #{tpu_custom_call.1} parent=5 // pred_check
        _
      $region10: #{tpu_custom_call.1} parent=5 // pred_check_branch
        %302 = sbr.rel (%p299) target = $region12
      $region11: #{tpu_custom_call.1} parent=5 // pred_region
        %s303 = ssub.s32 %s22, 1
        // Predicated region
        $region13: #{tpu_custom_call.1} parent=11 // pred_check
          %p304 = pneg %p95
        $region14: #{tpu_custom_call.1} parent=11 // pred_check_branch
          %306 = sbr.rel (%p304) target = $region16
        $region15: #{tpu_custom_call.1} parent=11 // pred_region
          _
        $region16: #{tpu_custom_call.1} parent=11 // pred_fallthru
          _
        // Predicated region
        $region17: #{tpu_custom_call.1} parent=11 // pred_check
          %p307 = pneg %p116
        $region18: #{tpu_custom_call.1} parent=11 // pred_check_branch
          %309 = sbr.rel (%p307) target = $region20
        $region19: #{tpu_custom_call.1} parent=11 // pred_region
          _
        $region20: #{tpu_custom_call.1} parent=11 // pred_fallthru
          _
        // Predicated region
        $region21: #{tpu_custom_call.1} parent=11 // pred_check
          %p310 = pneg %p137
        $region22: #{tpu_custom_call.1} parent=11 // pred_check_branch
          %312 = sbr.rel (%p310) target = $region24
        $region23: #{tpu_custom_call.1} parent=11 // pred_region
          _
        $region24: #{tpu_custom_call.1} parent=11 // pred_fallthru
          _
        // Predicated region
        $region25: #{tpu_custom_call.1} parent=11 // pred_check
          %p313 = pneg %p158
        $region26: #{tpu_custom_call.1} parent=11 // pred_check_branch
          %315 = sbr.rel (%p313) target = $region28
        $region27: #{tpu_custom_call.1} parent=11 // pred_region
          _
        $region28: #{tpu_custom_call.1} parent=11 // pred_fallthru
          _
        // Predicated region
        $region29: #{tpu_custom_call.1} parent=11 // pred_check
          %p316 = pneg %p179
        $region30: #{tpu_custom_call.1} parent=11 // pred_check_branch
          %318 = sbr.rel (%p316) target = $region32
        $region31: #{tpu_custom_call.1} parent=11 // pred_region
          _
        $region32: #{tpu_custom_call.1} parent=11 // pred_fallthru
          _
        // Predicated region
        $region33: #{tpu_custom_call.1} parent=11 // pred_check
          %p319 = pneg %p200
        $region34: #{tpu_custom_call.1} parent=11 // pred_check_branch
          %321 = sbr.rel (%p319) target = $region36
        $region35: #{tpu_custom_call.1} parent=11 // pred_region
          _
        $region36: #{tpu_custom_call.1} parent=11 // pred_fallthru
          _
        // Predicated region
        $region37: #{tpu_custom_call.1} parent=11 // pred_check
          %p322 = pneg %p221
        $region38: #{tpu_custom_call.1} parent=11 // pred_check_branch
          %324 = sbr.rel (%p322) target = $region40
        $region39: #{tpu_custom_call.1} parent=11 // pred_region
          _
        $region40: #{tpu_custom_call.1} parent=11 // pred_fallthru
          _
        // Predicated region
        $region41: #{tpu_custom_call.1} parent=11 // pred_check
          %p325 = pneg %p242
        $region42: #{tpu_custom_call.1} parent=11 // pred_check_branch
          %327 = sbr.rel (%p325) target = $region44
        $region43: #{tpu_custom_call.1} parent=11 // pred_region
          _
        $region44: #{tpu_custom_call.1} parent=11 // pred_fallthru
          _
        // Predicated region
        $region45: #{tpu_custom_call.1} parent=11 // pred_check
          %p328 = pneg %p263
        $region46: #{tpu_custom_call.1} parent=11 // pred_check_branch
          %330 = sbr.rel (%p328) target = $region48
        $region47: #{tpu_custom_call.1} parent=11 // pred_region
          _
        $region48: #{tpu_custom_call.1} parent=11 // pred_fallthru
          _
      $region12: #{tpu_custom_call.1} parent=5 // pred_fallthru
        _
      %p331 = scmp.lt.s32.totalorder %s22, 2
      // Predicated region
      $region49: #{tpu_custom_call.1} parent=5 // pred_check
        %p332 = pneg %p331
      $region50: #{tpu_custom_call.1} parent=5 // pred_check_branch
        %334 = sbr.rel (%p332) target = $region52
      $region51: #{tpu_custom_call.1} parent=5 // pred_region
        // Predicated region
        $region53: #{tpu_custom_call.1} parent=51 // pred_check
          %p335 = pneg %p42
        $region54: #{tpu_custom_call.1} parent=51 // pred_check_branch
          %337 = sbr.rel (%p335) target = $region56
        $region55: #{tpu_custom_call.1} parent=51 // pred_region
          %p338 = scmp.lt.s32.totalorder %s22, 1
          %s339 = scalar_select %p338, %s22, 1
          %s340 = smul.addr %s339, 4
          %s341 = scalar_lea.vmem %s0, %s340
        $region56: #{tpu_custom_call.1} parent=51 // pred_fallthru
          _
        // Predicated region
        $region57: #{tpu_custom_call.1} parent=51 // pred_check
          %p342 = pneg %p68
        $region58: #{tpu_custom_call.1} parent=51 // pred_check_branch
          %344 = sbr.rel (%p342) target = $region60
        $region59: #{tpu_custom_call.1} parent=51 // pred_region
          %p345 = scmp.lt.s32.totalorder %s22, 1
          %s346 = scalar_select %p345, %s22, 1
          %s347 = smul.addr %s346, 4
          %s348 = scalar_lea.vmem %s1, %s347
        $region60: #{tpu_custom_call.1} parent=51 // pred_fallthru
          _
      $region52: #{tpu_custom_call.1} parent=5 // pred_fallthru
        _
      %p349 = scmp.le.s32.totalorder 1, %s22
      %p350 = scmp.lt.s32.totalorder %s22, 3
      %p351 = pnand %p349, %p350
      %p352 = pneg %p351
      // Predicated region
      $region61: #{tpu_custom_call.1} parent=5 // pred_check
        _
      $region62: #{tpu_custom_call.1} parent=5 // pred_check_branch
        %354 = sbr.rel (%p351) target = $region64
      $region63: #{tpu_custom_call.1} parent=5 // pred_region
        %s355 = ssub.s32 %s22, 1
        %p356 = scmp.lt.s32.totalorder %s27, 1
        %s357 = scalar_select %p356, %s27, 1
        %s358 = smul.addr %s357, 4
        %s359 = scalar_lea.vmem %s0, %s358
        %p360 = pneg %p48
        %p361 = pneg %p45
        %p362 = scmp.lt.s32.totalorder %s27, 1
        %s363 = scalar_select %p362, %s27, 1
        %s364 = smul.addr %s363, 4
        %s365 = scalar_lea.vmem %s1, %s364
        %p366 = pneg %p74
        %p367 = pneg %p71
        %p368 = pneg %p95
        %p369 = pneg %p92
        %p370 = pneg %p116
        %p371 = pneg %p113
        %p372 = pneg %p137
        %p373 = pneg %p134
        %p374 = pneg %p158
        %p375 = pneg %p155
        %p376 = pneg %p179
        %p377 = pneg %p176
        %p378 = pneg %p200
        %p379 = pneg %p197
        %p380 = pneg %p221
        %p381 = pneg %p218
        %p382 = pneg %p242
        %p383 = pneg %p239
        %p384 = pneg %p263
        %p385 = pneg %p260
        %p386 = pneg %p289
        %p387 = pneg %p286
        %s388 = sand.u32 %s276, 1
        %s389 = scalar_lea.sflag [#allocation4], %s388
        %s390 = sand.u32 %s276, 1
        %s391 = smul.addr %s390, 4
        %s392 = scalar_lea.vmem [#allocation3], %s391
        %p393 = scmp.lt.s32.totalorder %s27, 1
        %s394 = scalar_select %p393, %s27, 1
        %s395 = smul.addr %s394, 4
        %s396 = scalar_lea.vmem %s0, %s395
        %p397 = scmp.lt.s32.totalorder %s27, 1
        %s398 = scalar_select %p397, %s27, 1
        %s399 = smul.addr %s398, 4
        %s400 = scalar_lea.vmem %s1, %s399
        %v402 = vld [vmem:[%s2] sm:$0xff]
        %v403 = vld [vmem:[%s2 + $0x8] sm:$0xff]
        %v404 = vld [vmem:[%s2 + $0x10] sm:$0xff]
        %v405 = vld [vmem:[%s2 + $0x18] sm:$0xff]
        %407 = vset.pattern.permute.xlu0 0
        %408 = vperm.xlu0 %407, %v402
        %v409 = vpop.permute.xlu0 %408
        %412 = vset.pattern.permute.xlu0 0
        %413 = vperm.xlu0 %412, %v403
        %v414 = vpop.permute.xlu0 %413
        %417 = vset.pattern.permute.xlu0 0
        %418 = vperm.xlu0 %417, %v404
        %v419 = vpop.permute.xlu0 %418
        %422 = vset.pattern.permute.xlu0 0
        %423 = vperm.xlu0 %422, %v405
        %v424 = vpop.permute.xlu0 %423
        %v426 = vld [vmem:[%s3] sm:$0xff]
        %v427 = vld [vmem:[%s3 + $0x8] sm:$0xff]
        %v428 = vld [vmem:[%s3 + $0x10] sm:$0xff]
        %v429 = vld [vmem:[%s3 + $0x18] sm:$0xff]
        %431 = vset.pattern.permute.xlu0 0
        %432 = vperm.xlu0 %431, %v426
        %v433 = vpop.permute.xlu0 %432
        %436 = vset.pattern.permute.xlu0 0
        %437 = vperm.xlu0 %436, %v427
        %v438 = vpop.permute.xlu0 %437
        %441 = vset.pattern.permute.xlu0 0
        %442 = vperm.xlu0 %441, %v428
        %v443 = vpop.permute.xlu0 %442
        %446 = vset.pattern.permute.xlu0 0
        %447 = vperm.xlu0 %446, %v429
        %v448 = vpop.permute.xlu0 %447
        %v450 = vld [vmem:[%s4] sm:$0xff]
        %v451 = vld [vmem:[%s4 + $0x8] sm:$0xff]
        %v452 = vld [vmem:[%s4 + $0x10] sm:$0xff]
        %v453 = vld [vmem:[%s4 + $0x18] sm:$0xff]
        %455 = vset.pattern.permute.xlu0 0
        %456 = vperm.xlu0 %455, %v450
        %v457 = vpop.permute.xlu0 %456
        %460 = vset.pattern.permute.xlu0 0
        %461 = vperm.xlu0 %460, %v451
        %v462 = vpop.permute.xlu0 %461
        %465 = vset.pattern.permute.xlu0 0
        %466 = vperm.xlu0 %465, %v452
        %v467 = vpop.permute.xlu0 %466
        %470 = vset.pattern.permute.xlu0 0
        %471 = vperm.xlu0 %470, %v453
        %v472 = vpop.permute.xlu0 %471
        %v474 = vld [vmem:[%s5] sm:$0xff]
        %v475 = vld [vmem:[%s5 + $0x8] sm:$0xff]
        %v476 = vld [vmem:[%s5 + $0x10] sm:$0xff]
        %v477 = vld [vmem:[%s5 + $0x18] sm:$0xff]
        %v478 = vpack.c.bf16 %v475, %v474
        %v479 = vpack.c.bf16 %v477, %v476
        %v480 = vld [vmem:[%s6] sm:$0xff]
        %v481 = vld [vmem:[%s6 + $0x8] sm:$0xff]
        %v482 = vld [vmem:[%s6 + $0x10] sm:$0xff]
        %v483 = vld [vmem:[%s6 + $0x18] sm:$0xff]
        %485 = vset.pattern.permute.xlu0 0
        %486 = vperm.xlu0 %485, %v480
        %v487 = vpop.permute.xlu0 %486
        %490 = vset.pattern.permute.xlu0 0
        %491 = vperm.xlu0 %490, %v481
        %v492 = vpop.permute.xlu0 %491
        %495 = vset.pattern.permute.xlu0 0
        %496 = vperm.xlu0 %495, %v482
        %v497 = vpop.permute.xlu0 %496
        %500 = vset.pattern.permute.xlu0 0
        %501 = vperm.xlu0 %500, %v483
        %v502 = vpop.permute.xlu0 %501
        %v504 = vld [vmem:[%s7] sm:$0xff]
        %v505 = vld [vmem:[%s7 + $0x8] sm:$0xff]
        %v506 = vld [vmem:[%s7 + $0x10] sm:$0xff]
        %v507 = vld [vmem:[%s7 + $0x18] sm:$0xff]
        %v508 = vpack.c.bf16 %v505, %v504
        %v509 = vpack.c.bf16 %v507, %v506
        %v510 = vld [vmem:[%s8] sm:$0xff]
        %v511 = vld [vmem:[%s8 + $0x8] sm:$0xff]
        %v512 = vld [vmem:[%s8 + $0x10] sm:$0xff]
        %v513 = vld [vmem:[%s8 + $0x18] sm:$0xff]
        %515 = vset.pattern.permute.xlu0 0
        %516 = vperm.xlu0 %515, %v510
        %v517 = vpop.permute.xlu0 %516
        %520 = vset.pattern.permute.xlu0 0
        %521 = vperm.xlu0 %520, %v511
        %v522 = vpop.permute.xlu0 %521
        %525 = vset.pattern.permute.xlu0 0
        %526 = vperm.xlu0 %525, %v512
        %v527 = vpop.permute.xlu0 %526
        %530 = vset.pattern.permute.xlu0 0
        %531 = vperm.xlu0 %530, %v513
        %v532 = vpop.permute.xlu0 %531
        %v534 = vld [vmem:[%s9] sm:$0xff]
        %v535 = vld [vmem:[%s9 + $0x8] sm:$0xff]
        %v536 = vld [vmem:[%s9 + $0x10] sm:$0xff]
        %v537 = vld [vmem:[%s9 + $0x18] sm:$0xff]
        %539 = vset.pattern.permute.xlu0 0
        %540 = vperm.xlu0 %539, %v534
        %v541 = vpop.permute.xlu0 %540
        %544 = vset.pattern.permute.xlu0 0
        %545 = vperm.xlu0 %544, %v535
        %v546 = vpop.permute.xlu0 %545
        %549 = vset.pattern.permute.xlu0 0
        %550 = vperm.xlu0 %549, %v536
        %v551 = vpop.permute.xlu0 %550
        %554 = vset.pattern.permute.xlu0 0
        %555 = vperm.xlu0 %554, %v537
        %v556 = vpop.permute.xlu0 %555
        %v558 = vld [vmem:[#allocation2] sm:$0x1]
        %560 = vset.pattern.permute.xlu0 0
        %561 = vperm.xlu0 %560, %v558
        %v562 = vpop.permute.xlu0 %561
        %v564 = vlaneseq
        %v565 = vshrl.u32 %v564, 7
        %v566 = vsub.s32 0, %v565
        %v567 = vrot.slane %v562, %v566
        %v568 = vld [vmem:[%s396] sm:$0xf]
        %v569 = vld [vmem:[%s400] sm:$0xf]
        %v571 = vlaneseq
        %v572 = vshrl.u32 %v571, 7
        %v573 = vsub.s32 0, %v572
        %v574 = vrot.slane %v568, %v573
        %v575 = vlaneseq
        %v576 = vshrl.u32 %v575, 7
        %v577 = vsub.s32 1, %v576
        %v578 = vrot.slane %v568, %v577
        %v579 = vlaneseq
        %v580 = vshrl.u32 %v579, 7
        %v581 = vsub.s32 2, %v580
        %v582 = vrot.slane %v568, %v581
        %v583 = vlaneseq
        %v584 = vshrl.u32 %v583, 7
        %v585 = vsub.s32 3, %v584
        %v586 = vrot.slane %v568, %v585
        %v591 = vmul.f32 %v409, %v574
        %v592 = vmul.f32 %v409, %v578
        %v593 = vmul.f32 %v409, %v582
        %v594 = vmul.f32 %v409, %v586
        %v595 = vmul.f32 %v414, %v574
        %v596 = vmul.f32 %v414, %v578
        %v597 = vmul.f32 %v414, %v582
        %v598 = vmul.f32 %v414, %v586
        %v599 = vmul.f32 %v419, %v574
        %v600 = vmul.f32 %v419, %v578
        %v601 = vmul.f32 %v419, %v582
        %v602 = vmul.f32 %v419, %v586
        %v603 = vmul.f32 %v424, %v574
        %v604 = vmul.f32 %v424, %v578
        %v605 = vmul.f32 %v424, %v582
        %v606 = vmul.f32 %v424, %v586
        %v608 = vlaneseq
        %v609 = vshrl.u32 %v608, 7
        %v610 = vsub.s32 0, %v609
        %v611 = vrot.slane %v569, %v610
        %v612 = vlaneseq
        %v613 = vshrl.u32 %v612, 7
        %v614 = vsub.s32 1, %v613
        %v615 = vrot.slane %v569, %v614
        %v616 = vlaneseq
        %v617 = vshrl.u32 %v616, 7
        %v618 = vsub.s32 2, %v617
        %v619 = vrot.slane %v569, %v618
        %v620 = vlaneseq
        %v621 = vshrl.u32 %v620, 7
        %v622 = vsub.s32 3, %v621
        %v623 = vrot.slane %v569, %v622
        %v628 = vmul.f32 %v433, %v611
        %v629 = vmul.f32 %v433, %v615
        %v630 = vmul.f32 %v433, %v619
        %v631 = vmul.f32 %v433, %v623
        %v632 = vmul.f32 %v438, %v611
        %v633 = vmul.f32 %v438, %v615
        %v634 = vmul.f32 %v438, %v619
        %v635 = vmul.f32 %v438, %v623
        %v636 = vmul.f32 %v443, %v611
        %v637 = vmul.f32 %v443, %v615
        %v638 = vmul.f32 %v443, %v619
        %v639 = vmul.f32 %v443, %v623
        %v640 = vmul.f32 %v448, %v611
        %v641 = vmul.f32 %v448, %v615
        %v642 = vmul.f32 %v448, %v619
        %v643 = vmul.f32 %v448, %v623
        %v644 = vadd.f32 %v591, %v628
        %v645 = vadd.f32 %v592, %v629
        %v646 = vadd.f32 %v593, %v630
        %v647 = vadd.f32 %v594, %v631
        %v648 = vadd.f32 %v595, %v632
        %v649 = vadd.f32 %v596, %v633
        %v650 = vadd.f32 %v597, %v634
        %v651 = vadd.f32 %v598, %v635
        %v652 = vadd.f32 %v599, %v636
        %v653 = vadd.f32 %v600, %v637
        %v654 = vadd.f32 %v601, %v638
        %v655 = vadd.f32 %v602, %v639
        %v656 = vadd.f32 %v603, %v640
        %v657 = vadd.f32 %v604, %v641
        %v658 = vadd.f32 %v605, %v642
        %v659 = vadd.f32 %v606, %v643
        %v660 = vadd.f32 %v644, %v457
        %v661 = vadd.f32 %v645, %v457
        %v662 = vadd.f32 %v646, %v457
        %v663 = vadd.f32 %v647, %v457
        %v664 = vadd.f32 %v648, %v462
        %v665 = vadd.f32 %v649, %v462
        %v666 = vadd.f32 %v650, %v462
        %v667 = vadd.f32 %v651, %v462
        %v668 = vadd.f32 %v652, %v467
        %v669 = vadd.f32 %v653, %v467
        %v670 = vadd.f32 %v654, %v467
        %v671 = vadd.f32 %v655, %v467
        %v672 = vadd.f32 %v656, %v472
        %v673 = vadd.f32 %v657, %v472
        %v674 = vadd.f32 %v658, %v472
        %v675 = vadd.f32 %v659, %v472
        %v676 = vtanh.pop %v660
        %v677 = vtanh.pop %v661
        %v678 = vtanh.pop %v662
        %v679 = vtanh.pop %v663
        %v680 = vtanh.pop %v664
        %v681 = vtanh.pop %v665
        %v682 = vtanh.pop %v666
        %v683 = vtanh.pop %v667
        %v684 = vtanh.pop %v668
        %v685 = vtanh.pop %v669
        %v686 = vtanh.pop %v670
        %v687 = vtanh.pop %v671
        %v688 = vtanh.pop %v672
        %v689 = vtanh.pop %v673
        %v690 = vtanh.pop %v674
        %v691 = vtanh.pop %v675
        %v692 = vpack.c.bf16 %v680, %v676
        %v693 = vpack.c.bf16 %v681, %v677
        %v694 = vpack.c.bf16 %v682, %v678
        %v695 = vpack.c.bf16 %v683, %v679
        %v696 = vpack.c.bf16 %v688, %v684
        %v697 = vpack.c.bf16 %v689, %v685
        %v698 = vpack.c.bf16 %v690, %v686
        %v699 = vpack.c.bf16 %v691, %v687
        %vm700 = vcmask 261120
        %v702 = vsel %vm700, %v478, 0
        %v705 = vsel %vm700, %v479, 0
        %707 = vmatprep.subr.bf16.mxu0 0
        %708 = vmatpush1.bf16.msra.mxu0 0
        %709 = vmatprep.subr.bf16.mxu0 0
        %710 = vmatpush1.bf16.msra.mxu0 0
        %711 = vmatprep.subr.bf16.mxu0 0
        %712 = vmatpush1.bf16.msra.mxu0 0
        %713 = vmatprep.subr.bf16.mxu0 0
        %714 = vmatpush1.bf16.msra.mxu0 0
        %715 = vmatprep.subr.bf16.mxu0 0
        %716 = vmatpush1.bf16.msra.mxu0 0
        %717 = vmatprep.subr.bf16.mxu0 0
        %718 = vmatpush1.bf16.msra.mxu0 0
        %719 = vmatprep.subr.bf16.mxu0 %v697
        %720 = vmatpush1.bf16.msra.mxu0 %v696
        %721 = vmatprep.subr.bf16.mxu0 %v693
        %722 = vmatpush1.bf16.msra.mxu0 %v692
        %723 = vmatprep.subr.bf16.mxu0 0
        %724 = vmatpush2.bf16.msra.mxu0 0
        %725 = vmatprep.subr.bf16.mxu0 0
        %726 = vmatpush2.bf16.msra.mxu0 0
        %727 = vmatprep.subr.bf16.mxu0 0
        %728 = vmatpush2.bf16.msra.mxu0 0
        %729 = vmatprep.subr.bf16.mxu0 0
        %730 = vmatpush2.bf16.msra.mxu0 0
        %731 = vmatprep.subr.bf16.mxu0 0
        %732 = vmatpush2.bf16.msra.mxu0 0
        %733 = vmatprep.subr.bf16.mxu0 0
        %734 = vmatpush2.bf16.msra.mxu0 0
        %735 = vmatprep.subr.bf16.mxu0 0
        %736 = vmatpush2.bf16.msra.mxu0 0
        %737 = vmatprep.subr.bf16.mxu0 0
        %738 = vmatpush2.bf16.msra.mxu0 0
        %739 = vmatprep.mubr.bf16.mxu0 0
        %740 = vmatmul.mubr.bf16.gmra.mxu0 %v702
        %v741 = vpop.f32.mrf.mxu0
        %v742 = vadd.f32 %v487, %v741
        %v743 = vpop.f32.mrf.mxu0
        %v744 = vadd.f32 %v487, %v743
        %v745 = vpop.f32.mrf.mxu0
        %v746 = vadd.f32 %v492, %v745
        %v747 = vpop.f32.mrf.mxu0
        %v748 = vadd.f32 %v492, %v747
        %749 = vmatprep.mubr.bf16.mxu0 0
        %750 = vmatmul.mubr.bf16.gmra.mxu0 %v705
        %v751 = vpop.f32.mrf.mxu0
        %v752 = vadd.f32 %v497, %v751
        %v753 = vpop.f32.mrf.mxu0
        %v754 = vadd.f32 %v497, %v753
        %v755 = vpop.f32.mrf.mxu0
        %v756 = vadd.f32 %v502, %v755
        %v757 = vpop.f32.mrf.mxu0
        %v758 = vadd.f32 %v502, %v757
        %759 = vdwg.mxu0
        %760 = vmatprep.subr.bf16.mxu0 0
        %761 = vmatpush1.bf16.msra.mxu0 0
        %762 = vmatprep.subr.bf16.mxu0 0
        %763 = vmatpush1.bf16.msra.mxu0 0
        %764 = vmatprep.subr.bf16.mxu0 0
        %765 = vmatpush1.bf16.msra.mxu0 0
        %766 = vmatprep.subr.bf16.mxu0 0
        %767 = vmatpush1.bf16.msra.mxu0 0
        %768 = vmatprep.subr.bf16.mxu0 0
        %769 = vmatpush1.bf16.msra.mxu0 0
        %770 = vmatprep.subr.bf16.mxu0 0
        %771 = vmatpush1.bf16.msra.mxu0 0
        %772 = vmatprep.subr.bf16.mxu0 %v699
        %773 = vmatpush1.bf16.msra.mxu0 %v698
        %774 = vmatprep.subr.bf16.mxu0 %v695
        %775 = vmatpush1.bf16.msra.mxu0 %v694
        %776 = vmatprep.subr.bf16.mxu0 0
        %777 = vmatpush2.bf16.msra.mxu0 0
        %778 = vmatprep.subr.bf16.mxu0 0
        %779 = vmatpush2.bf16.msra.mxu0 0
        %780 = vmatprep.subr.bf16.mxu0 0
        %781 = vmatpush2.bf16.msra.mxu0 0
        %782 = vmatprep.subr.bf16.mxu0 0
        %783 = vmatpush2.bf16.msra.mxu0 0
        %784 = vmatprep.subr.bf16.mxu0 0
        %785 = vmatpush2.bf16.msra.mxu0 0
        %786 = vmatprep.subr.bf16.mxu0 0
        %787 = vmatpush2.bf16.msra.mxu0 0
        %788 = vmatprep.subr.bf16.mxu0 0
        %789 = vmatpush2.bf16.msra.mxu0 0
        %790 = vmatprep.subr.bf16.mxu0 0
        %791 = vmatpush2.bf16.msra.mxu0 0
        %792 = vmatprep.mubr.bf16.mxu0 0
        %793 = vmatmul.mubr.bf16.gmra.mxu0 %v702
        %v794 = vpop.f32.mrf.mxu0
        %v795 = vadd.f32 %v487, %v794
        %v796 = vpop.f32.mrf.mxu0
        %v797 = vadd.f32 %v487, %v796
        %v798 = vpop.f32.mrf.mxu0
        %v799 = vadd.f32 %v492, %v798
        %v800 = vpop.f32.mrf.mxu0
        %v801 = vadd.f32 %v492, %v800
        %802 = vmatprep.mubr.bf16.mxu0 0
        %803 = vmatmul.mubr.bf16.gmra.mxu0 %v705
        %v804 = vpop.f32.mrf.mxu0
        %v805 = vadd.f32 %v497, %v804
        %v806 = vpop.f32.mrf.mxu0
        %v807 = vadd.f32 %v497, %v806
        %v808 = vpop.f32.mrf.mxu0
        %v809 = vadd.f32 %v502, %v808
        %v810 = vpop.f32.mrf.mxu0
        %v811 = vadd.f32 %v502, %v810
        %812 = vdwg.mxu0
        %v813 = vtanh.pop %v742
        %v814 = vtanh.pop %v744
        %v815 = vtanh.pop %v795
        %v816 = vtanh.pop %v797
        %v817 = vtanh.pop %v746
        %v818 = vtanh.pop %v748
        %v819 = vtanh.pop %v799
        %v820 = vtanh.pop %v801
        %v821 = vtanh.pop %v752
        %v822 = vtanh.pop %v754
        %v823 = vtanh.pop %v805
        %v824 = vtanh.pop %v807
        %v825 = vtanh.pop %v756
        %v826 = vtanh.pop %v758
        %v827 = vtanh.pop %v809
        %v828 = vtanh.pop %v811
        %v829 = vpack.c.bf16 %v817, %v813
        %v830 = vpack.c.bf16 %v818, %v814
        %v831 = vpack.c.bf16 %v819, %v815
        %v832 = vpack.c.bf16 %v820, %v816
        %v833 = vpack.c.bf16 %v825, %v821
        %v834 = vpack.c.bf16 %v826, %v822
        %v835 = vpack.c.bf16 %v827, %v823
        %v836 = vpack.c.bf16 %v828, %v824
        %v838 = vsel %vm700, %v508, 0
        %v841 = vsel %vm700, %v509, 0
        %843 = vmatprep.subr.bf16.mxu0 0
        %844 = vmatpush1.bf16.msra.mxu0 0
        %845 = vmatprep.subr.bf16.mxu0 0
        %846 = vmatpush1.bf16.msra.mxu0 0
        %847 = vmatprep.subr.bf16.mxu0 0
        %848 = vmatpush1.bf16.msra.mxu0 0
        %849 = vmatprep.subr.bf16.mxu0 0
        %850 = vmatpush1.bf16.msra.mxu0 0
        %851 = vmatprep.subr.bf16.mxu0 0
        %852 = vmatpush1.bf16.msra.mxu0 0
        %853 = vmatprep.subr.bf16.mxu0 0
        %854 = vmatpush1.bf16.msra.mxu0 0
        %855 = vmatprep.subr.bf16.mxu0 %v834
        %856 = vmatpush1.bf16.msra.mxu0 %v833
        %857 = vmatprep.subr.bf16.mxu0 %v830
        %858 = vmatpush1.bf16.msra.mxu0 %v829
        %859 = vmatprep.subr.bf16.mxu0 0
        %860 = vmatpush2.bf16.msra.mxu0 0
        %861 = vmatprep.subr.bf16.mxu0 0
        %862 = vmatpush2.bf16.msra.mxu0 0
        %863 = vmatprep.subr.bf16.mxu0 0
        %864 = vmatpush2.bf16.msra.mxu0 0
        %865 = vmatprep.subr.bf16.mxu0 0
        %866 = vmatpush2.bf16.msra.mxu0 0
        %867 = vmatprep.subr.bf16.mxu0 0
        %868 = vmatpush2.bf16.msra.mxu0 0
        %869 = vmatprep.subr.bf16.mxu0 0
        %870 = vmatpush2.bf16.msra.mxu0 0
        %871 = vmatprep.subr.bf16.mxu0 0
        %872 = vmatpush2.bf16.msra.mxu0 0
        %873 = vmatprep.subr.bf16.mxu0 0
        %874 = vmatpush2.bf16.msra.mxu0 0
        %875 = vmatprep.mubr.bf16.mxu0 0
        %876 = vmatmul.mubr.bf16.gmra.mxu0 %v838
        %v877 = vpop.f32.mrf.mxu0
        %v878 = vadd.f32 %v517, %v877
        %v879 = vpop.f32.mrf.mxu0
        %v880 = vadd.f32 %v517, %v879
        %v881 = vpop.f32.mrf.mxu0
        %v882 = vadd.f32 %v522, %v881
        %v883 = vpop.f32.mrf.mxu0
        %v884 = vadd.f32 %v522, %v883
        %885 = vmatprep.mubr.bf16.mxu0 0
        %886 = vmatmul.mubr.bf16.gmra.mxu0 %v841
        %v887 = vpop.f32.mrf.mxu0
        %v888 = vadd.f32 %v527, %v887
        %v889 = vpop.f32.mrf.mxu0
        %v890 = vadd.f32 %v527, %v889
        %v891 = vpop.f32.mrf.mxu0
        %v892 = vadd.f32 %v532, %v891
        %v893 = vpop.f32.mrf.mxu0
        %v894 = vadd.f32 %v532, %v893
        %895 = vdwg.mxu0
        %896 = vmatprep.subr.bf16.mxu0 0
        %897 = vmatpush1.bf16.msra.mxu0 0
        %898 = vmatprep.subr.bf16.mxu0 0
        %899 = vmatpush1.bf16.msra.mxu0 0
        %900 = vmatprep.subr.bf16.mxu0 0
        %901 = vmatpush1.bf16.msra.mxu0 0
        %902 = vmatprep.subr.bf16.mxu0 0
        %903 = vmatpush1.bf16.msra.mxu0 0
        %904 = vmatprep.subr.bf16.mxu0 0
        %905 = vmatpush1.bf16.msra.mxu0 0
        %906 = vmatprep.subr.bf16.mxu0 0
        %907 = vmatpush1.bf16.msra.mxu0 0
        %908 = vmatprep.subr.bf16.mxu0 %v836
        %909 = vmatpush1.bf16.msra.mxu0 %v835
        %910 = vmatprep.subr.bf16.mxu0 %v832
        %911 = vmatpush1.bf16.msra.mxu0 %v831
        %912 = vmatprep.subr.bf16.mxu0 0
        %913 = vmatpush2.bf16.msra.mxu0 0
        %914 = vmatprep.subr.bf16.mxu0 0
        %915 = vmatpush2.bf16.msra.mxu0 0
        %916 = vmatprep.subr.bf16.mxu0 0
        %917 = vmatpush2.bf16.msra.mxu0 0
        %918 = vmatprep.subr.bf16.mxu0 0
        %919 = vmatpush2.bf16.msra.mxu0 0
        %920 = vmatprep.subr.bf16.mxu0 0
        %921 = vmatpush2.bf16.msra.mxu0 0
        %922 = vmatprep.subr.bf16.mxu0 0
        %923 = vmatpush2.bf16.msra.mxu0 0
        %924 = vmatprep.subr.bf16.mxu0 0
        %925 = vmatpush2.bf16.msra.mxu0 0
        %926 = vmatprep.subr.bf16.mxu0 0
        %927 = vmatpush2.bf16.msra.mxu0 0
        %928 = vmatprep.mubr.bf16.mxu0 0
        %929 = vmatmul.mubr.bf16.gmra.mxu0 %v838
        %v930 = vpop.f32.mrf.mxu0
        %v931 = vadd.f32 %v517, %v930
        %v932 = vpop.f32.mrf.mxu0
        %v933 = vadd.f32 %v517, %v932
        %v934 = vpop.f32.mrf.mxu0
        %v935 = vadd.f32 %v522, %v934
        %v936 = vpop.f32.mrf.mxu0
        %v937 = vadd.f32 %v522, %v936
        %938 = vmatprep.mubr.bf16.mxu0 0
        %939 = vmatmul.mubr.bf16.gmra.mxu0 %v841
        %v940 = vpop.f32.mrf.mxu0
        %v941 = vadd.f32 %v527, %v940
        %v942 = vpop.f32.mrf.mxu0
        %v943 = vadd.f32 %v527, %v942
        %v944 = vpop.f32.mrf.mxu0
        %v945 = vadd.f32 %v532, %v944
        %v946 = vpop.f32.mrf.mxu0
        %v947 = vadd.f32 %v532, %v946
        %948 = vdwg.mxu0
        %v949 = vtanh.pop %v878
        %v950 = vtanh.pop %v880
        %v951 = vtanh.pop %v931
        %v952 = vtanh.pop %v933
        %v953 = vtanh.pop %v882
        %v954 = vtanh.pop %v884
        %v955 = vtanh.pop %v935
        %v956 = vtanh.pop %v937
        %v957 = vtanh.pop %v888
        %v958 = vtanh.pop %v890
        %v959 = vtanh.pop %v941
        %v960 = vtanh.pop %v943
        %v961 = vtanh.pop %v892
        %v962 = vtanh.pop %v894
        %v963 = vtanh.pop %v945
        %v964 = vtanh.pop %v947
        %v965 = vmul.f32 %v541, %v949
        %v966 = vmul.f32 %v541, %v950
        %v967 = vmul.f32 %v541, %v951
        %v968 = vmul.f32 %v541, %v952
        %v969 = vmul.f32 %v546, %v953
        %v970 = vmul.f32 %v546, %v954
        %v971 = vmul.f32 %v546, %v955
        %v972 = vmul.f32 %v546, %v956
        %v973 = vmul.f32 %v551, %v957
        %v974 = vmul.f32 %v551, %v958
        %v975 = vmul.f32 %v551, %v959
        %v976 = vmul.f32 %v551, %v960
        %v977 = vmul.f32 %v556, %v961
        %v978 = vmul.f32 %v556, %v962
        %v979 = vmul.f32 %v556, %v963
        %v980 = vmul.f32 %v556, %v964
        %v981 = vadd.f32 %v965, %v969
        %v982 = vadd.f32 %v981, %v973
        %v983 = vadd.f32 %v982, %v977
        %v984 = vrot.slane %v983, 4
        %v985 = vadd.f32 %v983, %v984
        %v986 = vrot.slane %v985, 2
        %v987 = vadd.f32 %v985, %v986
        %v988 = vrot.slane %v987, 1
        %v989 = vadd.f32 %v987, %v988
        %v990 = vadd.f32 %v966, %v970
        %v991 = vadd.f32 %v990, %v974
        %v992 = vadd.f32 %v991, %v978
        %v993 = vrot.slane %v992, 4
        %v994 = vadd.f32 %v992, %v993
        %v995 = vrot.slane %v994, 2
        %v996 = vadd.f32 %v994, %v995
        %v997 = vrot.slane %v996, 1
        %v998 = vadd.f32 %v996, %v997
        %v999 = vadd.f32 %v967, %v971
        %v1000 = vadd.f32 %v999, %v975
        %v1001 = vadd.f32 %v1000, %v979
        %v1002 = vrot.slane %v1001, 4
        %v1003 = vadd.f32 %v1001, %v1002
        %v1004 = vrot.slane %v1003, 2
        %v1005 = vadd.f32 %v1003, %v1004
        %v1006 = vrot.slane %v1005, 1
        %v1007 = vadd.f32 %v1005, %v1006
        %v1008 = vadd.f32 %v968, %v972
        %v1009 = vadd.f32 %v1008, %v976
        %v1010 = vadd.f32 %v1009, %v980
        %v1011 = vrot.slane %v1010, 4
        %v1012 = vadd.f32 %v1010, %v1011
        %v1013 = vrot.slane %v1012, 2
        %v1014 = vadd.f32 %v1012, %v1013
        %v1015 = vrot.slane %v1014, 1
        %v1016 = vadd.f32 %v1014, %v1015
        %v1017 = vadd.f32 %v989, %v567
        %v1018 = vadd.f32 %v998, %v567
        %v1019 = vadd.f32 %v1007, %v567
        %v1020 = vadd.f32 %v1016, %v567
        %v1025 = vcombine.low %v1017, %v1018
        %v1026 = vcombine.low %v1019, %v1020
        %v1028 = vunpack.c.l.s4 1966171168
        %v1029 = vunpack.c.0.s8 %v1028
        %v1030 = vlaneseq
        %v1031 = vshrl.u32 %v1030, 7
        %v1032 = vsub.s32 %v1029, %v1031
        %v1033 = vrot.slane %v1025, %v1032
        %v1035 = vunpack.c.l.s4 1966171168
        %v1036 = vunpack.c.0.s8 %v1035
        %v1037 = vlaneseq
        %v1038 = vshrl.u32 %v1037, 7
        %v1039 = vsub.s32 %v1036, %v1038
        %v1040 = vrot.slane %v1026, %v1039
        %v1041 = vcombine.low %v1033, %v1040
        %v1043 = vunpack.c.l.s4 1966171168
        %v1044 = vunpack.c.0.s8 %v1043
        %v1045 = vlaneseq
        %v1046 = vshrl.u32 %v1045, 7
        %v1047 = vsub.s32 %v1044, %v1046
        %v1048 = vrot.slane %v1041, %v1047
        %v1050 = vlaneseq
        %vm1051 = vcmp.ge.s32.totalorder %v1050, 0
        %vm1052 = vcmp.lt.s32.totalorder %v1050, 512
        %vm1053 = vmand %vm1051, %vm1052
        %1054 = vst.msk [vmem:[%s392] sm:$0xf] %vm1053, %v1048
        %s1055 = sand.u32 %s276, 1
        %s1056 = scalar_lea.sflag [#allocation4], %s1055
        %s1057 = sand.u32 %s276, 1
        %s1058 = smul.addr %s1057, 4
        %s1059 = scalar_lea.vmem [#allocation3], %s1058
        // Predicated region
        $region65: #{tpu_custom_call.1} parent=63 // pred_check
          %p1060 = pneg %p286
        $region66: #{tpu_custom_call.1} parent=63 // pred_check_branch
          %1062 = sbr.rel (%p1060) target = $region68
        $region67: #{tpu_custom_call.1} parent=63 // pred_region
          %s1064 = ssub.s32 64, 64
          %1065 = vsyncadd %s1056, %s1064
          %s1066 = smul.addr %s27, 4
          %s1067 = smul.addr %s1066, 16
          %s1068 = scalar_lea.hbm %s11, %s1067
          %s1070 = sshll.u32 %s1059, 4
          %s1071 = int_to_ptr.vmem [resolvable:$true] %s1070
          %1073 = dma.vmem_to_hbm [thread:$0]  %s1071, 64, %s1068, %s1056
        $region68: #{tpu_custom_call.1} parent=63 // pred_fallthru
          _
      $region64: #{tpu_custom_call.1} parent=5 // pred_fallthru
        _
      %p1074 = scmp.le.s32.totalorder 2, %s22
      // Predicated region
      $region69: #{tpu_custom_call.1} parent=5 // pred_check
        %p1075 = pneg %p1074
      $region70: #{tpu_custom_call.1} parent=5 // pred_check_branch
        %1077 = sbr.rel (%p1075) target = $region72
      $region71: #{tpu_custom_call.1} parent=5 // pred_region
        %s1078 = ssub.s32 %s22, 2
        // Predicated region
        $region73: #{tpu_custom_call.1} parent=71 // pred_check
          %p1079 = pneg %p292
        $region74: #{tpu_custom_call.1} parent=71 // pred_check_branch
          %1081 = sbr.rel (%p1079) target = $region76
        $region75: #{tpu_custom_call.1} parent=71 // pred_region
          %s1082 = sand.u32 %s277, 1
          %s1083 = scalar_lea.sflag [#allocation4], %s1082
          %s1084 = sand.u32 %s277, 1
          %s1085 = smul.addr %s1084, 4
          %s1086 = scalar_lea.vmem [#allocation3], %s1085
          %1087 = dma.done %s1083, 64
        $region76: #{tpu_custom_call.1} parent=71 // pred_fallthru
          _
      $region72: #{tpu_custom_call.1} parent=5 // pred_fallthru
        _
    $region6: #{tpu_custom_call.1} parent=1 // loop_footer
      %s26 = sadd.s32 1, %s22
    $region7: #{tpu_custom_call.1} parent=1 // loop_footer_branch
      %21 = sbr.rel target = $region3
    $region8: #{tpu_custom_call.1} parent=1 // loop_exit
      _
    %1088 = vsyncpa [#allocation4], 1
    %s1089 = scalar_lea.sflag [#allocation4], 1
    %1090 = vsyncpa %s1089, 1

</llo_original>
